<compile_context>
chip_gen: v7x
topology: tpu7x:2x2x1
jax: 0.10.0
libtpu: 0.0.40
codegen_flags: <defaults>
</compile_context>

<pallas_src>
import functools

import jax
import jax.numpy as jnp
import numpy as np
from jax.experimental import pallas as pl
from jax.experimental.pallas import tpu as pltpu

NUM_LAYERS = 3
HIDDEN = 64          # module hard-codes hidden size 64
HP = 128             # lane-padded gate / output width (one full vreg lane width)


def lstm_classifier_kernel(x_ref,        # VMEM (TB, 64)        gathered embeddings
                           w_ref,        # VMEM (L, 64, 3*HP)   packed [i|g|o] gate weights
                           b_ref,        # VMEM (L, 1, 3*HP)    packed b_ih + b_hh
                           fcw_ref,      # VMEM (64, HP)        fc weight (transposed, lane-padded)
                           fcb_ref,      # VMEM (1, HP)         fc bias (lane-padded)
                           out_ref):     # VMEM (TB, HP)        lane-dense padded logits
    num_layers = w_ref.shape[0]
    x = x_ref[...]                                               # (TB, 64)

    # 3-layer LSTM, single timestep (T == 1), h_0 = c_0 = 0:
    #   gates = x @ w_ih^T + (b_ih + b_hh);  c = i * g;  h = o * tanh(c)
    # Gate blocks are [ i | g | o ], each 128 lanes (first 64 real, rest zero),
    # so every slice below is a full, lane-aligned vreg block.  Pad lanes stay
    # exact zeros through all layers (sigmoid(0)*tanh(0*...) == 0).
    for layer in range(num_layers):
        gates = (jnp.dot(x, w_ref[layer], preferred_element_type=jnp.float32)
                 + b_ref[layer])                                 # (TB, 3*HP)
        i = jax.nn.sigmoid(gates[:, 0 * HP:1 * HP])
        g = jnp.tanh(gates[:, 1 * HP:2 * HP])
        o = jax.nn.sigmoid(gates[:, 2 * HP:3 * HP])
        h = o * jnp.tanh(i * g)                                  # f * c_prev == 0 (c_0 = 0)
        x = h[:, :HIDDEN]                                        # feed K=64 into next dot

    # fc on the last hidden state (T == 1 -> feature == h); lane-dense store.
    out_ref[...] = (jnp.dot(x, fcw_ref[...], preferred_element_type=jnp.float32)
                    + fcb_ref[...])


def prepare_params(params):
    """One-time host-side repack: drop the f gate, transpose, lane-pad to 128."""
    H, L = HIDDEN, NUM_LAYERS
    C = params["fc_w"].shape[0]
    kept_gates = (0, 2, 3)                                       # PyTorch order i, f, g, o -> keep i, g, o

    w_p = jnp.zeros((L, H, 3 * HP), jnp.float32)
    b_p = jnp.zeros((L, 1, 3 * HP), jnp.float32)
    b_sum = params["b_ih"] + params["b_hh"]                      # (L, 4H)
    for l in range(L):
        for k, gate in enumerate(kept_gates):
            wg = params["w_ih"][l, gate * H:(gate + 1) * H, :]   # (H_out, H_in)
            w_p = w_p.at[l, :, k * HP:k * HP + H].set(wg.T)
            b_p = b_p.at[l, 0, k * HP:k * HP + H].set(b_sum[l, gate * H:(gate + 1) * H])

    fcw_p = jnp.zeros((H, HP), jnp.float32).at[:, :C].set(params["fc_w"].T)
    fcb_p = jnp.zeros((1, HP), jnp.float32).at[0, :C].set(params["fc_b"])
    return {"emb": params["emb"], "w": w_p, "b": b_p, "fcw": fcw_p, "fcb": fcb_p}


@functools.partial(jax.jit, static_argnames=("num_class",))
def text_classification_forward(text, offsets, prepared, *, num_class):
    """Pallas-backed equivalent of TextClassificationModel.forward(text, offsets)."""
    del offsets  # accepted-but-unused, same as the original module
    B, T = text.shape
    assert T == 1, "fc = Linear(64, C) on output.reshape(B, T*64) requires T == 1"

    # Embedding gather done wrapper-side (single fused XLA gather under this jit).
    x = jnp.take(prepared["emb"], text.reshape(B).astype(jnp.int32), axis=0)  # (B, 64)

    # Batch tile: multiple of 8 (f32 sublane), up to 256 rows per MXU pass.
    if B % 8 == 0:
        TB = 8
        while TB * 2 <= min(B, 256) and B % (TB * 2) == 0:
            TB *= 2
    else:
        TB = B
    grid = (B // TB,) if B % TB == 0 else (1,)

    grid_spec = pltpu.PrefetchScalarGridSpec(
        num_scalar_prefetch=0,
        grid=grid,
        in_specs=[
            pl.BlockSpec((TB, HIDDEN), lambda i: (i, 0)),                       # activations
            pl.BlockSpec((NUM_LAYERS, HIDDEN, 3 * HP), lambda i: (0, 0, 0)),    # gate weights (resident)
            pl.BlockSpec((NUM_LAYERS, 1, 3 * HP), lambda i: (0, 0, 0)),         # gate biases (resident)
            pl.BlockSpec((HIDDEN, HP), lambda i: (0, 0)),                       # fc weight (resident)
            pl.BlockSpec((1, HP), lambda i: (0, 0)),                            # fc bias (resident)
        ],
        out_specs=pl.BlockSpec((TB, HP), lambda i: (i, 0)),
    )
    out_pad = pl.pallas_call(
        lstm_classifier_kernel,
        out_shape=jax.ShapeDtypeStruct((B, HP), jnp.float32),
        grid_spec=grid_spec,
        compiler_params=pltpu.CompilerParams(dimension_semantics=("parallel",)),
    )(x, prepared["w"], prepared["b"], prepared["fcw"], prepared["fcb"])
    return out_pad[:, :num_class]


def init_params(key, vocab_size, num_class):
    """Deterministic parameter init (shapes match the nn.Module's __init__)."""
    H = HIDDEN
    ks = jax.random.split(key, 4 + 4 * NUM_LAYERS)
    bound = 1.0 / np.sqrt(H)
    params = {
        "emb": jax.random.uniform(ks[0], (vocab_size, H), jnp.float32, -0.5, 0.5),
        "fc_w": jax.random.uniform(ks[1], (num_class, H), jnp.float32, -bound, bound),
        "fc_b": jnp.zeros((num_class,), jnp.float32),
    }
    w_ih, w_hh, b_ih, b_hh = [], [], [], []
    for l in range(NUM_LAYERS):
        w_ih.append(jax.random.uniform(ks[4 + 4 * l], (4 * H, H), jnp.float32, -bound, bound))
        w_hh.append(jax.random.uniform(ks[5 + 4 * l], (4 * H, H), jnp.float32, -bound, bound))
        b_ih.append(jax.random.uniform(ks[6 + 4 * l], (4 * H,), jnp.float32, -bound, bound))
        b_hh.append(jax.random.uniform(ks[7 + 4 * l], (4 * H,), jnp.float32, -bound, bound))
    params["w_ih"] = jnp.stack(w_ih)   # (3, 4H, H)
    params["w_hh"] = jnp.stack(w_hh)   # (3, 4H, H)
    params["b_ih"] = jnp.stack(b_ih)   # (3, 4H)
    params["b_hh"] = jnp.stack(b_hh)   # (3, 4H)
    return params


def reference_forward(text, params):
    """Pure-JAX reference with the FULL LSTM math (incl. w_hh and forget gate)."""
    B, T = text.shape
    H = HIDDEN
    x = params["emb"][text]                                       # (B, T, H)
    for l in range(NUM_LAYERS):
        w_ih, w_hh = params["w_ih"][l], params["w_hh"][l]
        b = params["b_ih"][l] + params["b_hh"][l]
        h = jnp.zeros((B, H), jnp.float32)
        c = jnp.zeros((B, H), jnp.float32)
        outs = []
        for t in range(T):
            gates = x[:, t] @ w_ih.T + h @ w_hh.T + b
            i = jax.nn.sigmoid(gates[:, 0 * H:1 * H])
            f = jax.nn.sigmoid(gates[:, 1 * H:2 * H])
            g = jnp.tanh(gates[:, 2 * H:3 * H])
            o = jax.nn.sigmoid(gates[:, 3 * H:4 * H])
            c = f * c + i * g
            h = o * jnp.tanh(c)
            outs.append(h)
        x = jnp.stack(outs, axis=1)
    feat = x.reshape(B, -1)
    return feat @ params["fc_w"].T + params["fc_b"]


if __name__ == "__main__":
    vocab_size, num_class = 100, 4
    B, T = 8, 1   # T must be 1 for the module's fc to be shape-consistent
    key = jax.random.PRNGKey(0)
    k_params, k_text = jax.random.split(key)

    params = init_params(k_params, vocab_size, num_class)
    prepared = prepare_params(params)                 # one-time repack (hoisted out of fwd)
    text = jax.random.randint(k_text, (B, T), 0, vocab_size, dtype=jnp.int32)
    offsets = jnp.zeros((B,), jnp.int32)              # accepted-but-unused, like the module

    logits = text_classification_forward(text, offsets, prepared, num_class=num_class)
    jax.block_until_ready(logits)

    ref = reference_forward(text, params)
    np.testing.assert_allclose(np.asarray(logits), np.asarray(ref),
                               rtol=1e-4, atol=1e-4)
    print("KERNEL_OK")
</pallas_src>

<mosaic_0001>
module attributes {stable_mosaic.version = 11 : i64} {
  func.func @lstm_classifier_kernel(%arg0: i32, %arg1: memref<8x64xf32, #tpu.memory_space<vmem>>, %arg2: memref<3x64x384xf32, #tpu.memory_space<vmem>>, %arg3: memref<3x1x384xf32, #tpu.memory_space<vmem>>, %arg4: memref<64x128xf32, #tpu.memory_space<vmem>>, %arg5: memref<1x128xf32, #tpu.memory_space<vmem>>, %arg6: memref<8x128xf32, #tpu.memory_space<vmem>>) attributes {dimension_semantics = [#tpu.dimension_semantics<parallel>], iteration_bounds = array<i64: 1>, scalar_prefetch = 0 : i64, scratch_operands = 0 : i64, tpu.core_type = #tpu.core_type<tc>, window_params = [{transform_indices = @transform_0, window_bounds = array<i64: 8, 64>}, {pipeline_mode = #tpu.pipeline_mode<synchronous>, transform_indices = @transform_1, window_bounds = array<i64: 3, 64, 384>}, {pipeline_mode = #tpu.pipeline_mode<synchronous>, transform_indices = @transform_2, window_bounds = array<i64: 3, 1, 384>}, {pipeline_mode = #tpu.pipeline_mode<synchronous>, transform_indices = @transform_3, window_bounds = array<i64: 64, 128>}, {pipeline_mode = #tpu.pipeline_mode<synchronous>, transform_indices = @transform_4, window_bounds = array<i64: 1, 128>}, {transform_indices = @transform_5, window_bounds = array<i64: 8, 128>}]} {
    %c0 = arith.constant 0 : index
    %c0_0 = arith.constant 0 : index
    %0 = vector.load %arg1[%c0, %c0_0] : memref<8x64xf32, #tpu.memory_space<vmem>>, vector<8x64xf32>
    %c0_1 = arith.constant 0 : index
    %c0_2 = arith.constant 0 : index
    %c0_3 = arith.constant 0 : index
    %1 = vector.load %arg2[%c0_1, %c0_2, %c0_3] : memref<3x64x384xf32, #tpu.memory_space<vmem>>, vector<1x64x384xf32>
    %2 = vector.shape_cast %1 : vector<1x64x384xf32> to vector<64x384xf32>
    %cst = arith.constant dense<0.000000e+00> : vector<8x384xf32>
    %3 = tpu.matmul %0, %2, %cst {dimension_numbers = #tpu.dot_dimension_numbers<[1], [0], [0], [1], [0, 0, 1, 1], [], []>} : vector<8x64xf32>, vector<64x384xf32>, vector<8x384xf32> -> vector<8x384xf32>
    %c0_4 = arith.constant 0 : index
    %c0_5 = arith.constant 0 : index
    %c0_6 = arith.constant 0 : index
    %4 = vector.load %arg3[%c0_4, %c0_5, %c0_6] : memref<3x1x384xf32, #tpu.memory_space<vmem>>, vector<1x1x384xf32>
    %5 = vector.shape_cast %4 : vector<1x1x384xf32> to vector<1x384xf32>
    %6 = vector.broadcast %5 : vector<1x384xf32> to vector<8x384xf32>
    %7 = arith.addf %3, %6 : vector<8x384xf32>
    %8 = vector.extract_strided_slice %7 {offsets = [0, 0], sizes = [8, 128], strides = [1, 1]} : vector<8x384xf32> to vector<8x128xf32>
    %9 = arith.negf %8 : vector<8x128xf32>
    %10 = math.exp %9 : vector<8x128xf32>
    %cst_7 = arith.constant 1.000000e+00 : f32
    %11 = vector.broadcast %cst_7 : f32 to vector<8x128xf32>
    %12 = arith.addf %11, %10 : vector<8x128xf32>
    %13 = arith.divf %11, %12 : vector<8x128xf32>
    %14 = vector.extract_strided_slice %7 {offsets = [0, 128], sizes = [8, 128], strides = [1, 1]} : vector<8x384xf32> to vector<8x128xf32>
    %15 = math.tanh %14 : vector<8x128xf32>
    %16 = vector.extract_strided_slice %7 {offsets = [0, 256], sizes = [8, 128], strides = [1, 1]} : vector<8x384xf32> to vector<8x128xf32>
    %17 = arith.negf %16 : vector<8x128xf32>
    %18 = math.exp %17 : vector<8x128xf32>
    %cst_8 = arith.constant 1.000000e+00 : f32
    %19 = vector.broadcast %cst_8 : f32 to vector<8x128xf32>
    %20 = arith.addf %19, %18 : vector<8x128xf32>
    %21 = arith.divf %19, %20 : vector<8x128xf32>
    %22 = arith.mulf %13, %15 : vector<8x128xf32>
    %23 = math.tanh %22 : vector<8x128xf32>
    %24 = arith.mulf %21, %23 : vector<8x128xf32>
    %25 = vector.extract_strided_slice %24 {offsets = [0, 0], sizes = [8, 64], strides = [1, 1]} : vector<8x128xf32> to vector<8x64xf32>
    %c1 = arith.constant 1 : index
    %c0_9 = arith.constant 0 : index
    %c0_10 = arith.constant 0 : index
    %26 = vector.load %arg2[%c1, %c0_9, %c0_10] : memref<3x64x384xf32, #tpu.memory_space<vmem>>, vector<1x64x384xf32>
    %27 = vector.shape_cast %26 : vector<1x64x384xf32> to vector<64x384xf32>
    %cst_11 = arith.constant dense<0.000000e+00> : vector<8x384xf32>
    %28 = tpu.matmul %25, %27, %cst_11 {dimension_numbers = #tpu.dot_dimension_numbers<[1], [0], [0], [1], [0, 0, 1, 1], [], []>} : vector<8x64xf32>, vector<64x384xf32>, vector<8x384xf32> -> vector<8x384xf32>
    %c1_12 = arith.constant 1 : index
    %c0_13 = arith.constant 0 : index
    %c0_14 = arith.constant 0 : index
    %29 = vector.load %arg3[%c1_12, %c0_13, %c0_14] : memref<3x1x384xf32, #tpu.memory_space<vmem>>, vector<1x1x384xf32>
    %30 = vector.shape_cast %29 : vector<1x1x384xf32> to vector<1x384xf32>
    %31 = vector.broadcast %30 : vector<1x384xf32> to vector<8x384xf32>
    %32 = arith.addf %28, %31 : vector<8x384xf32>
    %33 = vector.extract_strided_slice %32 {offsets = [0, 0], sizes = [8, 128], strides = [1, 1]} : vector<8x384xf32> to vector<8x128xf32>
    %34 = arith.negf %33 : vector<8x128xf32>
    %35 = math.exp %34 : vector<8x128xf32>
    %cst_15 = arith.constant 1.000000e+00 : f32
    %36 = vector.broadcast %cst_15 : f32 to vector<8x128xf32>
    %37 = arith.addf %36, %35 : vector<8x128xf32>
    %38 = arith.divf %36, %37 : vector<8x128xf32>
    %39 = vector.extract_strided_slice %32 {offsets = [0, 128], sizes = [8, 128], strides = [1, 1]} : vector<8x384xf32> to vector<8x128xf32>
    %40 = math.tanh %39 : vector<8x128xf32>
    %41 = vector.extract_strided_slice %32 {offsets = [0, 256], sizes = [8, 128], strides = [1, 1]} : vector<8x384xf32> to vector<8x128xf32>
    %42 = arith.negf %41 : vector<8x128xf32>
    %43 = math.exp %42 : vector<8x128xf32>
    %cst_16 = arith.constant 1.000000e+00 : f32
    %44 = vector.broadcast %cst_16 : f32 to vector<8x128xf32>
    %45 = arith.addf %44, %43 : vector<8x128xf32>
    %46 = arith.divf %44, %45 : vector<8x128xf32>
    %47 = arith.mulf %38, %40 : vector<8x128xf32>
    %48 = math.tanh %47 : vector<8x128xf32>
    %49 = arith.mulf %46, %48 : vector<8x128xf32>
    %50 = vector.extract_strided_slice %49 {offsets = [0, 0], sizes = [8, 64], strides = [1, 1]} : vector<8x128xf32> to vector<8x64xf32>
    %c2 = arith.constant 2 : index
    %c0_17 = arith.constant 0 : index
    %c0_18 = arith.constant 0 : index
    %51 = vector.load %arg2[%c2, %c0_17, %c0_18] : memref<3x64x384xf32, #tpu.memory_space<vmem>>, vector<1x64x384xf32>
    %52 = vector.shape_cast %51 : vector<1x64x384xf32> to vector<64x384xf32>
    %cst_19 = arith.constant dense<0.000000e+00> : vector<8x384xf32>
    %53 = tpu.matmul %50, %52, %cst_19 {dimension_numbers = #tpu.dot_dimension_numbers<[1], [0], [0], [1], [0, 0, 1, 1], [], []>} : vector<8x64xf32>, vector<64x384xf32>, vector<8x384xf32> -> vector<8x384xf32>
    %c2_20 = arith.constant 2 : index
    %c0_21 = arith.constant 0 : index
    %c0_22 = arith.constant 0 : index
    %54 = vector.load %arg3[%c2_20, %c0_21, %c0_22] : memref<3x1x384xf32, #tpu.memory_space<vmem>>, vector<1x1x384xf32>
    %55 = vector.shape_cast %54 : vector<1x1x384xf32> to vector<1x384xf32>
    %56 = vector.broadcast %55 : vector<1x384xf32> to vector<8x384xf32>
    %57 = arith.addf %53, %56 : vector<8x384xf32>
    %58 = vector.extract_strided_slice %57 {offsets = [0, 0], sizes = [8, 128], strides = [1, 1]} : vector<8x384xf32> to vector<8x128xf32>
    %59 = arith.negf %58 : vector<8x128xf32>
    %60 = math.exp %59 : vector<8x128xf32>
    %cst_23 = arith.constant 1.000000e+00 : f32
    %61 = vector.broadcast %cst_23 : f32 to vector<8x128xf32>
    %62 = arith.addf %61, %60 : vector<8x128xf32>
    %63 = arith.divf %61, %62 : vector<8x128xf32>
    %64 = vector.extract_strided_slice %57 {offsets = [0, 128], sizes = [8, 128], strides = [1, 1]} : vector<8x384xf32> to vector<8x128xf32>
    %65 = math.tanh %64 : vector<8x128xf32>
    %66 = vector.extract_strided_slice %57 {offsets = [0, 256], sizes = [8, 128], strides = [1, 1]} : vector<8x384xf32> to vector<8x128xf32>
    %67 = arith.negf %66 : vector<8x128xf32>
    %68 = math.exp %67 : vector<8x128xf32>
    %cst_24 = arith.constant 1.000000e+00 : f32
    %69 = vector.broadcast %cst_24 : f32 to vector<8x128xf32>
    %70 = arith.addf %69, %68 : vector<8x128xf32>
    %71 = arith.divf %69, %70 : vector<8x128xf32>
    %72 = arith.mulf %63, %65 : vector<8x128xf32>
    %73 = math.tanh %72 : vector<8x128xf32>
    %74 = arith.mulf %71, %73 : vector<8x128xf32>
    %75 = vector.extract_strided_slice %74 {offsets = [0, 0], sizes = [8, 64], strides = [1, 1]} : vector<8x128xf32> to vector<8x64xf32>
    %c0_25 = arith.constant 0 : index
    %c0_26 = arith.constant 0 : index
    %76 = vector.load %arg4[%c0_25, %c0_26] : memref<64x128xf32, #tpu.memory_space<vmem>>, vector<64x128xf32>
    %cst_27 = arith.constant dense<0.000000e+00> : vector<8x128xf32>
    %77 = tpu.matmul %75, %76, %cst_27 {dimension_numbers = #tpu.dot_dimension_numbers<[1], [0], [0], [1], [0, 0, 1, 1], [], []>} : vector<8x64xf32>, vector<64x128xf32>, vector<8x128xf32> -> vector<8x128xf32>
    %c0_28 = arith.constant 0 : index
    %c0_29 = arith.constant 0 : index
    %78 = vector.load %arg5[%c0_28, %c0_29] : memref<1x128xf32, #tpu.memory_space<vmem>>, vector<1x128xf32>
    %79 = vector.broadcast %78 : vector<1x128xf32> to vector<8x128xf32>
    %80 = arith.addf %77, %79 : vector<8x128xf32>
    %c0_30 = arith.constant 0 : index
    %c0_31 = arith.constant 0 : index
    %81 = vector.load %arg6[%c0_30, %c0_31] : memref<8x128xf32, #tpu.memory_space<vmem>>, vector<8x128xf32>
    tpu.vector_store %arg6[%c0_30, %c0_31], %80 {strides = array<i32>} : memref<8x128xf32, #tpu.memory_space<vmem>>, vector<8x128xf32>,
    return
  }
  func.func @transform_0(%arg0: i32) -> (i32, i32) {
    %c0_i32 = arith.constant 0 : i32
    %c0_i32_0 = arith.constant 0 : i32
    return %arg0, %c0_i32 : i32, i32
  }
  func.func @transform_1(%arg0: i32) -> (i32, i32, i32) {
    %c0_i32 = arith.constant 0 : i32
    %c0_i32_0 = arith.constant 0 : i32
    %c0_i32_1 = arith.constant 0 : i32
    %c0_i32_2 = arith.constant 0 : i32
    return %c0_i32, %c0_i32_0, %c0_i32_1 : i32, i32, i32
  }
  func.func @transform_2(%arg0: i32) -> (i32, i32, i32) {
    %c0_i32 = arith.constant 0 : i32
    %c0_i32_0 = arith.constant 0 : i32
    %c0_i32_1 = arith.constant 0 : i32
    %c0_i32_2 = arith.constant 0 : i32
    return %c0_i32, %c0_i32_0, %c0_i32_1 : i32, i32, i32
  }
  func.func @transform_3(%arg0: i32) -> (i32, i32) {
    %c0_i32 = arith.constant 0 : i32
    %c0_i32_0 = arith.constant 0 : i32
    %c0_i32_1 = arith.constant 0 : i32
    return %c0_i32, %c0_i32_0 : i32, i32
  }
  func.func @transform_4(%arg0: i32) -> (i32, i32) {
    %c0_i32 = arith.constant 0 : i32
    %c0_i32_0 = arith.constant 0 : i32
    %c0_i32_1 = arith.constant 0 : i32
    return %c0_i32, %c0_i32_0 : i32, i32
  }
  func.func @transform_5(%arg0: i32) -> (i32, i32) {
    %c0_i32 = arith.constant 0 : i32
    %c0_i32_0 = arith.constant 0 : i32
    return %arg0, %c0_i32 : i32, i32
  }
}

</mosaic_0001>

<llo_original>
// kernel: text_classification_forward.1
$region0: #{text_classification_forward.1}
  #allocation0 [shape = 'u32[]', space=smem, size = 0x4, offset = 0x4, fixed_abs, tag = 'smem constant byte address 0x4 - core index']
  #allocation1 [shape = 'u32[144,128]{1,0:T(1,128)}', space=vmem, size = 0x12000, scoped, tag = 'internal scratch']
  %s0 = inlined_call_operand.vmem [shape: f32[8,64], index: 0, kind: input, shape index: {}]
  %s1 = inlined_call_operand.hbm [shape: f32[3,64,384], index: 1, kind: input, shape index: {}]
  %s2 = inlined_call_operand.vmem [shape: f32[3,1,384], index: 2, kind: input, shape index: {}]
  %s3 = inlined_call_operand.vmem [shape: f32[64,128], index: 3, kind: input, shape index: {}]
  %s4 = inlined_call_operand.vmem [shape: f32[1,128], index: 4, kind: input, shape index: {}]
  %s5 = inlined_call_operand.vmem [shape: f32[8,128], index: 5, kind: output, shape index: {}]
  %s6 = sld [smem:[#allocation0]]
  $region34: #{text_classification_forward.1} parent=0
    _
  %s8 = ssub.s32 1, %s6
  %s9 = scalar_select 0, %s8, %s6
  $region1: #{text_classification_forward.1} parent=0
    #allocation2 [shape = 'u8[294912]{0}', space=vmem, size = 0x48000, scoped, tag = 'input window, operand 1, single buffered']
    #allocation3 [shape = 's32[1]{0}', space=sflag, size = 0x4, scoped, tag = 'scoped memory for text_classification_forward.1']
    %10 = vsyncpa [#allocation3], 0
    // Predicated region
    $region2: #{text_classification_forward.1} parent=1 // pred_check
      _
    $region3: #{text_classification_forward.1} parent=1 // pred_check_branch
      %12 = sbr.rel (0) target = $region5
    $region4: #{text_classification_forward.1} parent=1 // pred_region
      _
    $region5: #{text_classification_forward.1} parent=1 // pred_fallthru
      _
    // Predicated region
    $region6: #{text_classification_forward.1} parent=1 // pred_check
      _
    $region7: #{text_classification_forward.1} parent=1 // pred_check_branch
      %14 = sbr.rel (0) target = $region9
    $region8: #{text_classification_forward.1} parent=1 // pred_region
      %s16 = ssub.s32 9216, 9216
      %17 = vsyncadd [#allocation3], %s16
      %s18 = sshll.u32 [#allocation2], 4
      %s19 = int_to_ptr.vmem [resolvable:$true] %s18
      %24 = dma.hbm_to_vmem [thread:$0]  %s1, 9216, %s19, [#allocation3], 384, 384, 24
    $region9: #{text_classification_forward.1} parent=1 // pred_fallthru
      _
    // Predicated region
    $region10: #{text_classification_forward.1} parent=1 // pred_check
      _
    $region11: #{text_classification_forward.1} parent=1 // pred_check_branch
      %26 = sbr.rel (0) target = $region13
    $region12: #{text_classification_forward.1} parent=1 // pred_region
      _
    $region13: #{text_classification_forward.1} parent=1 // pred_fallthru
      _
    // Predicated region
    $region14: #{text_classification_forward.1} parent=1 // pred_check
      _
    $region15: #{text_classification_forward.1} parent=1 // pred_check_branch
      %28 = sbr.rel (0) target = $region17
    $region16: #{text_classification_forward.1} parent=1 // pred_region
      _
    $region17: #{text_classification_forward.1} parent=1 // pred_fallthru
      _
    // Predicated region
    $region18: #{text_classification_forward.1} parent=1 // pred_check
      _
    $region19: #{text_classification_forward.1} parent=1 // pred_check_branch
      %30 = sbr.rel (0) target = $region21
    $region20: #{text_classification_forward.1} parent=1 // pred_region
      _
    $region21: #{text_classification_forward.1} parent=1 // pred_fallthru
      _
    // Predicated region
    $region22: #{text_classification_forward.1} parent=1 // pred_check
      _
    $region23: #{text_classification_forward.1} parent=1 // pred_check_branch
      %32 = sbr.rel (0) target = $region25
    $region24: #{text_classification_forward.1} parent=1 // pred_region
      %33 = dma.done [#allocation3], 9216
    $region25: #{text_classification_forward.1} parent=1 // pred_fallthru
      _
    %v34 = vld [vmem:[%s0] sm:$0xff]
    %v35 = vld [vmem:[#allocation2] sm:$0xff]
    %v36 = vld [vmem:[#allocation2 + $0x8] sm:$0xff]
    %v37 = vld [vmem:[#allocation2 + $0x10] sm:$0xff]
    %v38 = vld [vmem:[#allocation2 + $0x18] sm:$0xff]
    %v39 = vld [vmem:[#allocation2 + $0x20] sm:$0xff]
    %v40 = vld [vmem:[#allocation2 + $0x28] sm:$0xff]
    %v41 = vld [vmem:[#allocation2 + $0x30] sm:$0xff]
    %v42 = vld [vmem:[#allocation2 + $0x38] sm:$0xff]
    %v43 = vld [vmem:[#allocation2 + $0x40] sm:$0xff]
    %v44 = vld [vmem:[#allocation2 + $0x48] sm:$0xff]
    %v45 = vld [vmem:[#allocation2 + $0x50] sm:$0xff]
    %v46 = vld [vmem:[#allocation2 + $0x58] sm:$0xff]
    %v47 = vld [vmem:[#allocation2 + $0x60] sm:$0xff]
    %v48 = vld [vmem:[#allocation2 + $0x68] sm:$0xff]
    %v49 = vld [vmem:[#allocation2 + $0x70] sm:$0xff]
    %v50 = vld [vmem:[#allocation2 + $0x78] sm:$0xff]
    %v51 = vld [vmem:[#allocation2 + $0x80] sm:$0xff]
    %v52 = vld [vmem:[#allocation2 + $0x88] sm:$0xff]
    %v53 = vld [vmem:[#allocation2 + $0x90] sm:$0xff]
    %v54 = vld [vmem:[#allocation2 + $0x98] sm:$0xff]
    %v55 = vld [vmem:[#allocation2 + $0xa0] sm:$0xff]
    %v56 = vld [vmem:[#allocation2 + $0xa8] sm:$0xff]
    %v57 = vld [vmem:[#allocation2 + $0xb0] sm:$0xff]
    %v58 = vld [vmem:[#allocation2 + $0xb8] sm:$0xff]
    %v59 = vld [vmem:[%s2] sm:$0x7]
    %v61 = vlaneseq
    %v62 = vshrl.u32 %v61, 7
    %v63 = vsub.s32 0, %v62
    %v64 = vrot.slane %v59, %v63
    %v65 = vlaneseq
    %v66 = vshrl.u32 %v65, 7
    %v67 = vsub.s32 1, %v66
    %v68 = vrot.slane %v59, %v67
    %v69 = vlaneseq
    %v70 = vshrl.u32 %v69, 7
    %v71 = vsub.s32 2, %v70
    %v72 = vrot.slane %v59, %v71
    %vm76 = vcmask 523264
    %v78 = vsel %vm76, %v34, 0
    %80 = vmatprep.subr.mxu0 %v36
    %81 = vmatpush1.msra.mxu0 %v35
    %82 = vmatprep.subr.mxu0 %v39
    %83 = vmatpush1.msra.mxu0 %v38
    %84 = vmatprep.subr.mxu0 %v42
    %85 = vmatpush1.msra.mxu0 %v41
    %86 = vmatprep.subr.mxu0 %v45
    %87 = vmatpush1.msra.mxu0 %v44
    %88 = vmatprep.subr.mxu0 %v48
    %89 = vmatpush1.msra.mxu0 %v47
    %90 = vmatprep.subr.mxu0 %v51
    %91 = vmatpush1.msra.mxu0 %v50
    %92 = vmatprep.subr.mxu0 %v54
    %93 = vmatpush1.msra.mxu0 %v53
    %94 = vmatprep.subr.mxu0 %v57
    %95 = vmatpush1.msra.mxu0 %v56
    %96 = vmatprep.subr.mxu0 0.0
    %97 = vmatpush1.msra.mxu0 0.0
    %98 = vmatprep.subr.mxu0 0.0
    %99 = vmatpush1.msra.mxu0 0.0
    %100 = vmatprep.subr.mxu0 0.0
    %101 = vmatpush1.msra.mxu0 0.0
    %102 = vmatprep.subr.mxu0 0.0
    %103 = vmatpush1.msra.mxu0 0.0
    %104 = vmatprep.subr.mxu0 0.0
    %105 = vmatpush1.msra.mxu0 0.0
    %106 = vmatprep.subr.mxu0 0.0
    %107 = vmatpush1.msra.mxu0 0.0
    %108 = vmatprep.subr.mxu0 0.0
    %109 = vmatpush1.msra.mxu0 0.0
    %110 = vmatprep.subr.mxu0 0.0
    %111 = vmatpush1.msra.mxu0 0.0
    %112 = vmatprep.subr.mxu0 0.0
    %113 = vmatpush1.msra.mxu0 0.0
    %114 = vmatprep.subr.mxu0 0.0
    %115 = vmatpush1.msra.mxu0 0.0
    %116 = vmatprep.subr.mxu0 0.0
    %117 = vmatpush1.msra.mxu0 0.0
    %118 = vmatprep.subr.mxu0 0.0
    %119 = vmatpush1.msra.mxu0 0.0
    %120 = vmatprep.subr.mxu0 0.0
    %121 = vmatpush1.msra.mxu0 0.0
    %122 = vmatprep.subr.mxu0 0.0
    %123 = vmatpush1.msra.mxu0 0.0
    %124 = vmatprep.subr.mxu0 0.0
    %125 = vmatpush1.msra.mxu0 0.0
    %126 = vmatprep.subr.mxu0 0.0
    %127 = vmatpush1.msra.mxu0 0.0
    %128 = vmatprep.subr.mxu0 0.0
    %129 = vmatpush1.msra.mxu0 0.0
    %130 = vmatprep.subr.mxu0 0.0
    %131 = vmatpush1.msra.mxu0 0.0
    %132 = vmatprep.subr.mxu0 0.0
    %133 = vmatpush1.msra.mxu0 0.0
    %134 = vmatprep.subr.mxu0 0.0
    %135 = vmatpush1.msra.mxu0 0.0
    %136 = vmatprep.subr.mxu0 0.0
    %137 = vmatpush1.msra.mxu0 0.0
    %138 = vmatprep.subr.mxu0 0.0
    %139 = vmatpush1.msra.mxu0 0.0
    %140 = vmatprep.subr.mxu0 0.0
    %141 = vmatpush1.msra.mxu0 0.0
    %142 = vmatprep.subr.mxu0 0.0
    %143 = vmatpush1.msra.mxu0 0.0
    %144 = vmatprep.mubr.f32.mxu0 0.0
    %145 = vmatmul.mubr.f32.gmra.mrb[0].mxu0 %v78
    %v146 = vpop.f32.mrb[0].mxu0
    %v147 = vadd.f32 %v64, %v146
    %v148 = vpop.f32.mrb[0].mxu0
    %v149 = vadd.f32 %v68, %v148
    %150 = vdwg.mxu0
    %151 = vmatprep.subr.mxu0 0.0
    %152 = vmatpush1.msra.mxu0 %v37
    %153 = vmatprep.subr.mxu0 0.0
    %154 = vmatpush1.msra.mxu0 %v40
    %155 = vmatprep.subr.mxu0 0.0
    %156 = vmatpush1.msra.mxu0 %v43
    %157 = vmatprep.subr.mxu0 0.0
    %158 = vmatpush1.msra.mxu0 %v46
    %159 = vmatprep.subr.mxu0 0.0
    %160 = vmatpush1.msra.mxu0 %v49
    %161 = vmatprep.subr.mxu0 0.0
    %162 = vmatpush1.msra.mxu0 %v52
    %163 = vmatprep.subr.mxu0 0.0
    %164 = vmatpush1.msra.mxu0 %v55
    %165 = vmatprep.subr.mxu0 0.0
    %166 = vmatpush1.msra.mxu0 %v58
    %167 = vmatprep.subr.mxu0 0.0
    %168 = vmatpush1.msra.mxu0 0.0
    %169 = vmatprep.subr.mxu0 0.0
    %170 = vmatpush1.msra.mxu0 0.0
    %171 = vmatprep.subr.mxu0 0.0
    %172 = vmatpush1.msra.mxu0 0.0
    %173 = vmatprep.subr.mxu0 0.0
    %174 = vmatpush1.msra.mxu0 0.0
    %175 = vmatprep.subr.mxu0 0.0
    %176 = vmatpush1.msra.mxu0 0.0
    %177 = vmatprep.subr.mxu0 0.0
    %178 = vmatpush1.msra.mxu0 0.0
    %179 = vmatprep.subr.mxu0 0.0
    %180 = vmatpush1.msra.mxu0 0.0
    %181 = vmatprep.subr.mxu0 0.0
    %182 = vmatpush1.msra.mxu0 0.0
    %183 = vmatprep.subr.mxu0 0.0
    %184 = vmatpush1.msra.mxu0 0.0
    %185 = vmatprep.subr.mxu0 0.0
    %186 = vmatpush1.msra.mxu0 0.0
    %187 = vmatprep.subr.mxu0 0.0
    %188 = vmatpush1.msra.mxu0 0.0
    %189 = vmatprep.subr.mxu0 0.0
    %190 = vmatpush1.msra.mxu0 0.0
    %191 = vmatprep.subr.mxu0 0.0
    %192 = vmatpush1.msra.mxu0 0.0
    %193 = vmatprep.subr.mxu0 0.0
    %194 = vmatpush1.msra.mxu0 0.0
    %195 = vmatprep.subr.mxu0 0.0
    %196 = vmatpush1.msra.mxu0 0.0
    %197 = vmatprep.subr.mxu0 0.0
    %198 = vmatpush1.msra.mxu0 0.0
    %199 = vmatprep.subr.mxu0 0.0
    %200 = vmatpush1.msra.mxu0 0.0
    %201 = vmatprep.subr.mxu0 0.0
    %202 = vmatpush1.msra.mxu0 0.0
    %203 = vmatprep.subr.mxu0 0.0
    %204 = vmatpush1.msra.mxu0 0.0
    %205 = vmatprep.subr.mxu0 0.0
    %206 = vmatpush1.msra.mxu0 0.0
    %207 = vmatprep.subr.mxu0 0.0
    %208 = vmatpush1.msra.mxu0 0.0
    %209 = vmatprep.subr.mxu0 0.0
    %210 = vmatpush1.msra.mxu0 0.0
    %211 = vmatprep.subr.mxu0 0.0
    %212 = vmatpush1.msra.mxu0 0.0
    %213 = vmatprep.subr.mxu0 0.0
    %214 = vmatpush1.msra.mxu0 0.0
    %215 = vmatprep.mubr.f32.mxu0 0.0
    %216 = vmatmul.mubr.f32.gmra.mrb[0].mxu0 %v78
    %v217 = vpop.f32.mrb[0].mxu0
    %v218 = vadd.f32 %v72, %v217
    %v219 = vpop.f32.mrb[0].mxu0
    %220 = vdwg.mxu0
    %v221 = vxor.u32 %v147, 2147483648
    %v222 = vmul.f32 %v221, 1.442695
    %v223 = vpow.pop %v222
    %v224 = vadd.f32 %v223, 1.0
    %v225 = vrcp.pop %v224
    %v226 = vmul.f32 1.0, %v225
    %v227 = vtanh.pop %v149
    %v228 = vxor.u32 %v218, 2147483648
    %v229 = vmul.f32 %v228, 1.442695
    %v230 = vpow.pop %v229
    %v231 = vadd.f32 %v230, 1.0
    %v232 = vrcp.pop %v231
    %v233 = vmul.f32 1.0, %v232
    %v234 = vmul.f32 %v226, %v227
    %v235 = vtanh.pop %v234
    %v236 = vmul.f32 %v233, %v235
    %s237 = scalar_lea.vmem [#allocation2], 192
    %v238 = vld [vmem:[%s237] sm:$0xff]
    %v239 = vld [vmem:[%s237 + $0x8] sm:$0xff]
    %v240 = vld [vmem:[%s237 + $0x10] sm:$0xff]
    %v241 = vld [vmem:[%s237 + $0x18] sm:$0xff]
    %v242 = vld [vmem:[%s237 + $0x20] sm:$0xff]
    %v243 = vld [vmem:[%s237 + $0x28] sm:$0xff]
    %v244 = vld [vmem:[%s237 + $0x30] sm:$0xff]
    %v245 = vld [vmem:[%s237 + $0x38] sm:$0xff]
    %v246 = vld [vmem:[%s237 + $0x40] sm:$0xff]
    %v247 = vld [vmem:[%s237 + $0x48] sm:$0xff]
    %v248 = vld [vmem:[%s237 + $0x50] sm:$0xff]
    %v249 = vld [vmem:[%s237 + $0x58] sm:$0xff]
    %v250 = vld [vmem:[%s237 + $0x60] sm:$0xff]
    %v251 = vld [vmem:[%s237 + $0x68] sm:$0xff]
    %v252 = vld [vmem:[%s237 + $0x70] sm:$0xff]
    %v253 = vld [vmem:[%s237 + $0x78] sm:$0xff]
    %v254 = vld [vmem:[%s237 + $0x80] sm:$0xff]
    %v255 = vld [vmem:[%s237 + $0x88] sm:$0xff]
    %v256 = vld [vmem:[%s237 + $0x90] sm:$0xff]
    %v257 = vld [vmem:[%s237 + $0x98] sm:$0xff]
    %v258 = vld [vmem:[%s237 + $0xa0] sm:$0xff]
    %v259 = vld [vmem:[%s237 + $0xa8] sm:$0xff]
    %v260 = vld [vmem:[%s237 + $0xb0] sm:$0xff]
    %v261 = vld [vmem:[%s237 + $0xb8] sm:$0xff]
    %s262 = scalar_lea.vmem %s2, 3
    %v263 = vld [vmem:[%s262] sm:$0x7]
    %v265 = vlaneseq
    %v266 = vshrl.u32 %v265, 7
    %v267 = vsub.s32 0, %v266
    %v268 = vrot.slane %v263, %v267
    %v269 = vlaneseq
    %v270 = vshrl.u32 %v269, 7
    %v271 = vsub.s32 1, %v270
    %v272 = vrot.slane %v263, %v271
    %v273 = vlaneseq
    %v274 = vshrl.u32 %v273, 7
    %v275 = vsub.s32 2, %v274
    %v276 = vrot.slane %v263, %v275
    %v281 = vsel %vm76, %v236, 0
    %283 = vmatprep.subr.mxu0 %v239
    %284 = vmatpush1.msra.mxu0 %v238
    %285 = vmatprep.subr.mxu0 %v242
    %286 = vmatpush1.msra.mxu0 %v241
    %287 = vmatprep.subr.mxu0 %v245
    %288 = vmatpush1.msra.mxu0 %v244
    %289 = vmatprep.subr.mxu0 %v248
    %290 = vmatpush1.msra.mxu0 %v247
    %291 = vmatprep.subr.mxu0 %v251
    %292 = vmatpush1.msra.mxu0 %v250
    %293 = vmatprep.subr.mxu0 %v254
    %294 = vmatpush1.msra.mxu0 %v253
    %295 = vmatprep.subr.mxu0 %v257
    %296 = vmatpush1.msra.mxu0 %v256
    %297 = vmatprep.subr.mxu0 %v260
    %298 = vmatpush1.msra.mxu0 %v259
    %299 = vmatprep.subr.mxu0 0.0
    %300 = vmatpush1.msra.mxu0 0.0
    %301 = vmatprep.subr.mxu0 0.0
    %302 = vmatpush1.msra.mxu0 0.0
    %303 = vmatprep.subr.mxu0 0.0
    %304 = vmatpush1.msra.mxu0 0.0
    %305 = vmatprep.subr.mxu0 0.0
    %306 = vmatpush1.msra.mxu0 0.0
    %307 = vmatprep.subr.mxu0 0.0
    %308 = vmatpush1.msra.mxu0 0.0
    %309 = vmatprep.subr.mxu0 0.0
    %310 = vmatpush1.msra.mxu0 0.0
    %311 = vmatprep.subr.mxu0 0.0
    %312 = vmatpush1.msra.mxu0 0.0
    %313 = vmatprep.subr.mxu0 0.0
    %314 = vmatpush1.msra.mxu0 0.0
    %315 = vmatprep.subr.mxu0 0.0
    %316 = vmatpush1.msra.mxu0 0.0
    %317 = vmatprep.subr.mxu0 0.0
    %318 = vmatpush1.msra.mxu0 0.0
    %319 = vmatprep.subr.mxu0 0.0
    %320 = vmatpush1.msra.mxu0 0.0
    %321 = vmatprep.subr.mxu0 0.0
    %322 = vmatpush1.msra.mxu0 0.0
    %323 = vmatprep.subr.mxu0 0.0
    %324 = vmatpush1.msra.mxu0 0.0
    %325 = vmatprep.subr.mxu0 0.0
    %326 = vmatpush1.msra.mxu0 0.0
    %327 = vmatprep.subr.mxu0 0.0
    %328 = vmatpush1.msra.mxu0 0.0
    %329 = vmatprep.subr.mxu0 0.0
    %330 = vmatpush1.msra.mxu0 0.0
    %331 = vmatprep.subr.mxu0 0.0
    %332 = vmatpush1.msra.mxu0 0.0
    %333 = vmatprep.subr.mxu0 0.0
    %334 = vmatpush1.msra.mxu0 0.0
    %335 = vmatprep.subr.mxu0 0.0
    %336 = vmatpush1.msra.mxu0 0.0
    %337 = vmatprep.subr.mxu0 0.0
    %338 = vmatpush1.msra.mxu0 0.0
    %339 = vmatprep.subr.mxu0 0.0
    %340 = vmatpush1.msra.mxu0 0.0
    %341 = vmatprep.subr.mxu0 0.0
    %342 = vmatpush1.msra.mxu0 0.0
    %343 = vmatprep.subr.mxu0 0.0
    %344 = vmatpush1.msra.mxu0 0.0
    %345 = vmatprep.subr.mxu0 0.0
    %346 = vmatpush1.msra.mxu0 0.0
    %347 = vmatprep.mubr.f32.mxu0 0.0
    %348 = vmatmul.mubr.f32.gmra.mrb[0].mxu0 %v281
    %v349 = vpop.f32.mrb[0].mxu0
    %v350 = vadd.f32 %v268, %v349
    %v351 = vpop.f32.mrb[0].mxu0
    %v352 = vadd.f32 %v272, %v351
    %353 = vdwg.mxu0
    %354 = vmatprep.subr.mxu0 0.0
    %355 = vmatpush1.msra.mxu0 %v240
    %356 = vmatprep.subr.mxu0 0.0
    %357 = vmatpush1.msra.mxu0 %v243
    %358 = vmatprep.subr.mxu0 0.0
    %359 = vmatpush1.msra.mxu0 %v246
    %360 = vmatprep.subr.mxu0 0.0
    %361 = vmatpush1.msra.mxu0 %v249
    %362 = vmatprep.subr.mxu0 0.0
    %363 = vmatpush1.msra.mxu0 %v252
    %364 = vmatprep.subr.mxu0 0.0
    %365 = vmatpush1.msra.mxu0 %v255
    %366 = vmatprep.subr.mxu0 0.0
    %367 = vmatpush1.msra.mxu0 %v258
    %368 = vmatprep.subr.mxu0 0.0
    %369 = vmatpush1.msra.mxu0 %v261
    %370 = vmatprep.subr.mxu0 0.0
    %371 = vmatpush1.msra.mxu0 0.0
    %372 = vmatprep.subr.mxu0 0.0
    %373 = vmatpush1.msra.mxu0 0.0
    %374 = vmatprep.subr.mxu0 0.0
    %375 = vmatpush1.msra.mxu0 0.0
    %376 = vmatprep.subr.mxu0 0.0
    %377 = vmatpush1.msra.mxu0 0.0
    %378 = vmatprep.subr.mxu0 0.0
    %379 = vmatpush1.msra.mxu0 0.0
    %380 = vmatprep.subr.mxu0 0.0
    %381 = vmatpush1.msra.mxu0 0.0
    %382 = vmatprep.subr.mxu0 0.0
    %383 = vmatpush1.msra.mxu0 0.0
    %384 = vmatprep.subr.mxu0 0.0
    %385 = vmatpush1.msra.mxu0 0.0
    %386 = vmatprep.subr.mxu0 0.0
    %387 = vmatpush1.msra.mxu0 0.0
    %388 = vmatprep.subr.mxu0 0.0
    %389 = vmatpush1.msra.mxu0 0.0
    %390 = vmatprep.subr.mxu0 0.0
    %391 = vmatpush1.msra.mxu0 0.0
    %392 = vmatprep.subr.mxu0 0.0
    %393 = vmatpush1.msra.mxu0 0.0
    %394 = vmatprep.subr.mxu0 0.0
    %395 = vmatpush1.msra.mxu0 0.0
    %396 = vmatprep.subr.mxu0 0.0
    %397 = vmatpush1.msra.mxu0 0.0
    %398 = vmatprep.subr.mxu0 0.0
    %399 = vmatpush1.msra.mxu0 0.0
    %400 = vmatprep.subr.mxu0 0.0
    %401 = vmatpush1.msra.mxu0 0.0
    %402 = vmatprep.subr.mxu0 0.0
    %403 = vmatpush1.msra.mxu0 0.0
    %404 = vmatprep.subr.mxu0 0.0
    %405 = vmatpush1.msra.mxu0 0.0
    %406 = vmatprep.subr.mxu0 0.0
    %407 = vmatpush1.msra.mxu0 0.0
    %408 = vmatprep.subr.mxu0 0.0
    %409 = vmatpush1.msra.mxu0 0.0
    %410 = vmatprep.subr.mxu0 0.0
    %411 = vmatpush1.msra.mxu0 0.0
    %412 = vmatprep.subr.mxu0 0.0
    %413 = vmatpush1.msra.mxu0 0.0
    %414 = vmatprep.subr.mxu0 0.0
    %415 = vmatpush1.msra.mxu0 0.0
    %416 = vmatprep.subr.mxu0 0.0
    %417 = vmatpush1.msra.mxu0 0.0
    %418 = vmatprep.mubr.f32.mxu0 0.0
    %419 = vmatmul.mubr.f32.gmra.mrb[0].mxu0 %v281
    %v420 = vpop.f32.mrb[0].mxu0
    %v421 = vadd.f32 %v276, %v420
    %v422 = vpop.f32.mrb[0].mxu0
    %423 = vdwg.mxu0
    %v424 = vxor.u32 %v350, 2147483648
    %v425 = vmul.f32 %v424, 1.442695
    %v426 = vpow.pop %v425
    %v427 = vadd.f32 %v426, 1.0
    %v428 = vrcp.pop %v427
    %v429 = vmul.f32 1.0, %v428
    %v430 = vtanh.pop %v352
    %v431 = vxor.u32 %v421, 2147483648
    %v432 = vmul.f32 %v431, 1.442695
    %v433 = vpow.pop %v432
    %v434 = vadd.f32 %v433, 1.0
    %v435 = vrcp.pop %v434
    %v436 = vmul.f32 1.0, %v435
    %v437 = vmul.f32 %v429, %v430
    %v438 = vtanh.pop %v437
    %v439 = vmul.f32 %v436, %v438
    %s440 = scalar_lea.vmem [#allocation2], 384
    %v441 = vld [vmem:[%s440] sm:$0xff]
    %v442 = vld [vmem:[%s440 + $0x8] sm:$0xff]
    %v443 = vld [vmem:[%s440 + $0x10] sm:$0xff]
    %v444 = vld [vmem:[%s440 + $0x18] sm:$0xff]
    %v445 = vld [vmem:[%s440 + $0x20] sm:$0xff]
    %v446 = vld [vmem:[%s440 + $0x28] sm:$0xff]
    %v447 = vld [vmem:[%s440 + $0x30] sm:$0xff]
    %v448 = vld [vmem:[%s440 + $0x38] sm:$0xff]
    %v449 = vld [vmem:[%s440 + $0x40] sm:$0xff]
    %v450 = vld [vmem:[%s440 + $0x48] sm:$0xff]
    %v451 = vld [vmem:[%s440 + $0x50] sm:$0xff]
    %v452 = vld [vmem:[%s440 + $0x58] sm:$0xff]
    %v453 = vld [vmem:[%s440 + $0x60] sm:$0xff]
    %v454 = vld [vmem:[%s440 + $0x68] sm:$0xff]
    %v455 = vld [vmem:[%s440 + $0x70] sm:$0xff]
    %v456 = vld [vmem:[%s440 + $0x78] sm:$0xff]
    %v457 = vld [vmem:[%s440 + $0x80] sm:$0xff]
    %v458 = vld [vmem:[%s440 + $0x88] sm:$0xff]
    %v459 = vld [vmem:[%s440 + $0x90] sm:$0xff]
    %v460 = vld [vmem:[%s440 + $0x98] sm:$0xff]
    %v461 = vld [vmem:[%s440 + $0xa0] sm:$0xff]
    %v462 = vld [vmem:[%s440 + $0xa8] sm:$0xff]
    %v463 = vld [vmem:[%s440 + $0xb0] sm:$0xff]
    %v464 = vld [vmem:[%s440 + $0xb8] sm:$0xff]
    %s465 = scalar_lea.vmem %s2, 6
    %v466 = vld [vmem:[%s465] sm:$0x7]
    %v468 = vlaneseq
    %v469 = vshrl.u32 %v468, 7
    %v470 = vsub.s32 0, %v469
    %v471 = vrot.slane %v466, %v470
    %v472 = vlaneseq
    %v473 = vshrl.u32 %v472, 7
    %v474 = vsub.s32 1, %v473
    %v475 = vrot.slane %v466, %v474
    %v476 = vlaneseq
    %v477 = vshrl.u32 %v476, 7
    %v478 = vsub.s32 2, %v477
    %v479 = vrot.slane %v466, %v478
    %v484 = vsel %vm76, %v439, 0
    %486 = vmatprep.subr.mxu0 %v442
    %487 = vmatpush1.msra.mxu0 %v441
    %488 = vmatprep.subr.mxu0 %v445
    %489 = vmatpush1.msra.mxu0 %v444
    %490 = vmatprep.subr.mxu0 %v448
    %491 = vmatpush1.msra.mxu0 %v447
    %492 = vmatprep.subr.mxu0 %v451
    %493 = vmatpush1.msra.mxu0 %v450
    %494 = vmatprep.subr.mxu0 %v454
    %495 = vmatpush1.msra.mxu0 %v453
    %496 = vmatprep.subr.mxu0 %v457
    %497 = vmatpush1.msra.mxu0 %v456
    %498 = vmatprep.subr.mxu0 %v460
    %499 = vmatpush1.msra.mxu0 %v459
    %500 = vmatprep.subr.mxu0 %v463
    %501 = vmatpush1.msra.mxu0 %v462
    %502 = vmatprep.subr.mxu0 0.0
    %503 = vmatpush1.msra.mxu0 0.0
    %504 = vmatprep.subr.mxu0 0.0
    %505 = vmatpush1.msra.mxu0 0.0
    %506 = vmatprep.subr.mxu0 0.0
    %507 = vmatpush1.msra.mxu0 0.0
    %508 = vmatprep.subr.mxu0 0.0
    %509 = vmatpush1.msra.mxu0 0.0
    %510 = vmatprep.subr.mxu0 0.0
    %511 = vmatpush1.msra.mxu0 0.0
    %512 = vmatprep.subr.mxu0 0.0
    %513 = vmatpush1.msra.mxu0 0.0
    %514 = vmatprep.subr.mxu0 0.0
    %515 = vmatpush1.msra.mxu0 0.0
    %516 = vmatprep.subr.mxu0 0.0
    %517 = vmatpush1.msra.mxu0 0.0
    %518 = vmatprep.subr.mxu0 0.0
    %519 = vmatpush1.msra.mxu0 0.0
    %520 = vmatprep.subr.mxu0 0.0
    %521 = vmatpush1.msra.mxu0 0.0
    %522 = vmatprep.subr.mxu0 0.0
    %523 = vmatpush1.msra.mxu0 0.0
    %524 = vmatprep.subr.mxu0 0.0
    %525 = vmatpush1.msra.mxu0 0.0
    %526 = vmatprep.subr.mxu0 0.0
    %527 = vmatpush1.msra.mxu0 0.0
    %528 = vmatprep.subr.mxu0 0.0
    %529 = vmatpush1.msra.mxu0 0.0
    %530 = vmatprep.subr.mxu0 0.0
    %531 = vmatpush1.msra.mxu0 0.0
    %532 = vmatprep.subr.mxu0 0.0
    %533 = vmatpush1.msra.mxu0 0.0
    %534 = vmatprep.subr.mxu0 0.0
    %535 = vmatpush1.msra.mxu0 0.0
    %536 = vmatprep.subr.mxu0 0.0
    %537 = vmatpush1.msra.mxu0 0.0
    %538 = vmatprep.subr.mxu0 0.0
    %539 = vmatpush1.msra.mxu0 0.0
    %540 = vmatprep.subr.mxu0 0.0
    %541 = vmatpush1.msra.mxu0 0.0
    %542 = vmatprep.subr.mxu0 0.0
    %543 = vmatpush1.msra.mxu0 0.0
    %544 = vmatprep.subr.mxu0 0.0
    %545 = vmatpush1.msra.mxu0 0.0
    %546 = vmatprep.subr.mxu0 0.0
    %547 = vmatpush1.msra.mxu0 0.0
    %548 = vmatprep.subr.mxu0 0.0
    %549 = vmatpush1.msra.mxu0 0.0
    %550 = vmatprep.mubr.f32.mxu0 0.0
    %551 = vmatmul.mubr.f32.gmra.mrb[0].mxu0 %v484
    %v552 = vpop.f32.mrb[0].mxu0
    %v553 = vadd.f32 %v471, %v552
    %v554 = vpop.f32.mrb[0].mxu0
    %v555 = vadd.f32 %v475, %v554
    %556 = vdwg.mxu0
    %557 = vmatprep.subr.mxu0 0.0
    %558 = vmatpush1.msra.mxu0 %v443
    %559 = vmatprep.subr.mxu0 0.0
    %560 = vmatpush1.msra.mxu0 %v446
    %561 = vmatprep.subr.mxu0 0.0
    %562 = vmatpush1.msra.mxu0 %v449
    %563 = vmatprep.subr.mxu0 0.0
    %564 = vmatpush1.msra.mxu0 %v452
    %565 = vmatprep.subr.mxu0 0.0
    %566 = vmatpush1.msra.mxu0 %v455
    %567 = vmatprep.subr.mxu0 0.0
    %568 = vmatpush1.msra.mxu0 %v458
    %569 = vmatprep.subr.mxu0 0.0
    %570 = vmatpush1.msra.mxu0 %v461
    %571 = vmatprep.subr.mxu0 0.0
    %572 = vmatpush1.msra.mxu0 %v464
    %573 = vmatprep.subr.mxu0 0.0
    %574 = vmatpush1.msra.mxu0 0.0
    %575 = vmatprep.subr.mxu0 0.0
    %576 = vmatpush1.msra.mxu0 0.0
    %577 = vmatprep.subr.mxu0 0.0
    %578 = vmatpush1.msra.mxu0 0.0
    %579 = vmatprep.subr.mxu0 0.0
    %580 = vmatpush1.msra.mxu0 0.0
    %581 = vmatprep.subr.mxu0 0.0
    %582 = vmatpush1.msra.mxu0 0.0
    %583 = vmatprep.subr.mxu0 0.0
    %584 = vmatpush1.msra.mxu0 0.0
    %585 = vmatprep.subr.mxu0 0.0
    %586 = vmatpush1.msra.mxu0 0.0
    %587 = vmatprep.subr.mxu0 0.0
    %588 = vmatpush1.msra.mxu0 0.0
    %589 = vmatprep.subr.mxu0 0.0
    %590 = vmatpush1.msra.mxu0 0.0
    %591 = vmatprep.subr.mxu0 0.0
    %592 = vmatpush1.msra.mxu0 0.0
    %593 = vmatprep.subr.mxu0 0.0
    %594 = vmatpush1.msra.mxu0 0.0
    %595 = vmatprep.subr.mxu0 0.0
    %596 = vmatpush1.msra.mxu0 0.0
    %597 = vmatprep.subr.mxu0 0.0
    %598 = vmatpush1.msra.mxu0 0.0
    %599 = vmatprep.subr.mxu0 0.0
    %600 = vmatpush1.msra.mxu0 0.0
    %601 = vmatprep.subr.mxu0 0.0
    %602 = vmatpush1.msra.mxu0 0.0
    %603 = vmatprep.subr.mxu0 0.0
    %604 = vmatpush1.msra.mxu0 0.0
    %605 = vmatprep.subr.mxu0 0.0
    %606 = vmatpush1.msra.mxu0 0.0
    %607 = vmatprep.subr.mxu0 0.0
    %608 = vmatpush1.msra.mxu0 0.0
    %609 = vmatprep.subr.mxu0 0.0
    %610 = vmatpush1.msra.mxu0 0.0
    %611 = vmatprep.subr.mxu0 0.0
    %612 = vmatpush1.msra.mxu0 0.0
    %613 = vmatprep.subr.mxu0 0.0
    %614 = vmatpush1.msra.mxu0 0.0
    %615 = vmatprep.subr.mxu0 0.0
    %616 = vmatpush1.msra.mxu0 0.0
    %617 = vmatprep.subr.mxu0 0.0
    %618 = vmatpush1.msra.mxu0 0.0
    %619 = vmatprep.subr.mxu0 0.0
    %620 = vmatpush1.msra.mxu0 0.0
    %621 = vmatprep.mubr.f32.mxu0 0.0
    %622 = vmatmul.mubr.f32.gmra.mrb[0].mxu0 %v484
    %v623 = vpop.f32.mrb[0].mxu0
    %v624 = vadd.f32 %v479, %v623
    %v625 = vpop.f32.mrb[0].mxu0
    %626 = vdwg.mxu0
    %v627 = vxor.u32 %v553, 2147483648
    %v628 = vmul.f32 %v627, 1.442695
    %v629 = vpow.pop %v628
    %v630 = vadd.f32 %v629, 1.0
    %v631 = vrcp.pop %v630
    %v632 = vmul.f32 1.0, %v631
    %v633 = vtanh.pop %v555
    %v634 = vxor.u32 %v624, 2147483648
    %v635 = vmul.f32 %v634, 1.442695
    %v636 = vpow.pop %v635
    %v637 = vadd.f32 %v636, 1.0
    %v638 = vrcp.pop %v637
    %v639 = vmul.f32 1.0, %v638
    %v640 = vmul.f32 %v632, %v633
    %v641 = vtanh.pop %v640
    %v642 = vmul.f32 %v639, %v641
    %v643 = vld [vmem:[%s3] sm:$0xff]
    %v644 = vld [vmem:[%s3 + $0x8] sm:$0xff]
    %v645 = vld [vmem:[%s3 + $0x10] sm:$0xff]
    %v646 = vld [vmem:[%s3 + $0x18] sm:$0xff]
    %v647 = vld [vmem:[%s3 + $0x20] sm:$0xff]
    %v648 = vld [vmem:[%s3 + $0x28] sm:$0xff]
    %v649 = vld [vmem:[%s3 + $0x30] sm:$0xff]
    %v650 = vld [vmem:[%s3 + $0x38] sm:$0xff]
    %v651 = vld [vmem:[%s4] sm:$0x1]
    %v653 = vlaneseq
    %v654 = vshrl.u32 %v653, 7
    %v655 = vsub.s32 0, %v654
    %v656 = vrot.slane %v651, %v655
    %v659 = vsel %vm76, %v642, 0
    %661 = vmatprep.subr.mxu0 0.0
    %662 = vmatpush1.msra.mxu0 %v643
    %663 = vmatprep.subr.mxu0 0.0
    %664 = vmatpush1.msra.mxu0 %v644
    %665 = vmatprep.subr.mxu0 0.0
    %666 = vmatpush1.msra.mxu0 %v645
    %667 = vmatprep.subr.mxu0 0.0
    %668 = vmatpush1.msra.mxu0 %v646
    %669 = vmatprep.subr.mxu0 0.0
    %670 = vmatpush1.msra.mxu0 %v647
    %671 = vmatprep.subr.mxu0 0.0
    %672 = vmatpush1.msra.mxu0 %v648
    %673 = vmatprep.subr.mxu0 0.0
    %674 = vmatpush1.msra.mxu0 %v649
    %675 = vmatprep.subr.mxu0 0.0
    %676 = vmatpush1.msra.mxu0 %v650
    %677 = vmatprep.subr.mxu0 0.0
    %678 = vmatpush1.msra.mxu0 0.0
    %679 = vmatprep.subr.mxu0 0.0
    %680 = vmatpush1.msra.mxu0 0.0
    %681 = vmatprep.subr.mxu0 0.0
    %682 = vmatpush1.msra.mxu0 0.0
    %683 = vmatprep.subr.mxu0 0.0
    %684 = vmatpush1.msra.mxu0 0.0
    %685 = vmatprep.subr.mxu0 0.0
    %686 = vmatpush1.msra.mxu0 0.0
    %687 = vmatprep.subr.mxu0 0.0
    %688 = vmatpush1.msra.mxu0 0.0
    %689 = vmatprep.subr.mxu0 0.0
    %690 = vmatpush1.msra.mxu0 0.0
    %691 = vmatprep.subr.mxu0 0.0
    %692 = vmatpush1.msra.mxu0 0.0
    %693 = vmatprep.subr.mxu0 0.0
    %694 = vmatpush1.msra.mxu0 0.0
    %695 = vmatprep.subr.mxu0 0.0
    %696 = vmatpush1.msra.mxu0 0.0
    %697 = vmatprep.subr.mxu0 0.0
    %698 = vmatpush1.msra.mxu0 0.0
    %699 = vmatprep.subr.mxu0 0.0
    %700 = vmatpush1.msra.mxu0 0.0
    %701 = vmatprep.subr.mxu0 0.0
    %702 = vmatpush1.msra.mxu0 0.0
    %703 = vmatprep.subr.mxu0 0.0
    %704 = vmatpush1.msra.mxu0 0.0
    %705 = vmatprep.subr.mxu0 0.0
    %706 = vmatpush1.msra.mxu0 0.0
    %707 = vmatprep.subr.mxu0 0.0
    %708 = vmatpush1.msra.mxu0 0.0
    %709 = vmatprep.subr.mxu0 0.0
    %710 = vmatpush1.msra.mxu0 0.0
    %711 = vmatprep.subr.mxu0 0.0
    %712 = vmatpush1.msra.mxu0 0.0
    %713 = vmatprep.subr.mxu0 0.0
    %714 = vmatpush1.msra.mxu0 0.0
    %715 = vmatprep.subr.mxu0 0.0
    %716 = vmatpush1.msra.mxu0 0.0
    %717 = vmatprep.subr.mxu0 0.0
    %718 = vmatpush1.msra.mxu0 0.0
    %719 = vmatprep.subr.mxu0 0.0
    %720 = vmatpush1.msra.mxu0 0.0
    %721 = vmatprep.subr.mxu0 0.0
    %722 = vmatpush1.msra.mxu0 0.0
    %723 = vmatprep.subr.mxu0 0.0
    %724 = vmatpush1.msra.mxu0 0.0
    %725 = vmatprep.mubr.f32.mxu0 0.0
    %726 = vmatmul.mubr.f32.gmra.mrb[0].mxu0 %v659
    %v727 = vpop.f32.mrb[0].mxu0
    %v728 = vadd.f32 %v656, %v727
    %v729 = vpop.f32.mrb[0].mxu0
    %730 = vdwg.mxu0
    %731 = vst [vmem:[%s5] sm:$0xff] %v728
    // Predicated region
    $region26: #{text_classification_forward.1} parent=1 // pred_check
      _
    $region27: #{text_classification_forward.1} parent=1 // pred_check_branch
      %733 = sbr.rel (0) target = $region29
    $region28: #{text_classification_forward.1} parent=1 // pred_region
      _
    $region29: #{text_classification_forward.1} parent=1 // pred_fallthru
      _
    // Predicated region
    $region30: #{text_classification_forward.1} parent=1 // pred_check
      _
    $region31: #{text_classification_forward.1} parent=1 // pred_check_branch
      %735 = sbr.rel (0) target = $region33
    $region32: #{text_classification_forward.1} parent=1 // pred_region
      _
    $region33: #{text_classification_forward.1} parent=1 // pred_fallthru
      _
    %736 = vsyncpa [#allocation3], 1

</llo_original>
